<compile_context>
chip_gen: v7x
topology: tpu7x:2x2x1
jax: 0.10.0
libtpu: 0.0.40
codegen_flags: <defaults>
</compile_context>

<pallas_src>
import functools

import jax
import jax.numpy as jnp
from jax.experimental import pallas as pl
from jax.experimental.pallas import tpu as pltpu


# ----------------------------------------------------------------------------
# Model configuration (small, consistent with the module's __init__ signature)
# ----------------------------------------------------------------------------
LSD = 16                  # latent state dim
LTD = 16                  # latent target/context dim (self._ltd never set in the
                          # reference __init__ — chosen equal to lsd here)
NUM_HIDDEN = (32, 32)     # num_hidden
ACTIVATION = "Tanh"       # getattr(nn, activation)()
IN_DIM = LSD + LTD        # 32
OUT_DIM = LSD * LSD       # 256 -> lane-dense output


def _act(x, name):
    if name == "Tanh":
        return jnp.tanh(x)
    if name == "ReLU":
        return jnp.maximum(x, 0.0)
    if name == "Sigmoid":
        return jax.nn.sigmoid(x)
    raise ValueError(f"unsupported activation {name}")


# ----------------------------------------------------------------------------
# Pallas kernel: fused 3-layer MLP
#   h = act(x @ W0 + b0); h = act(h @ W1 + b1); y = h @ W2 + b2
# bf16 matmul operands, f32 MXU accumulation, f32 bias/activation.
# ----------------------------------------------------------------------------
def _mlp_kernel(x_ref, w0_ref, b0_ref, w1_ref, b1_ref, w2_ref, b2_ref, out_ref,
                *, activation, compute_dtype):
    h = jnp.dot(x_ref[...].astype(compute_dtype), w0_ref[...],
                preferred_element_type=jnp.float32) + b0_ref[...]
    h = _act(h, activation)
    h = jnp.dot(h.astype(compute_dtype), w1_ref[...],
                preferred_element_type=jnp.float32) + b1_ref[...]
    h = _act(h, activation)
    y = jnp.dot(h.astype(compute_dtype), w2_ref[...],
                preferred_element_type=jnp.float32) + b2_ref[...]
    out_ref[...] = y.astype(out_ref.dtype)


def _num_tensorcores():
    """1 TC on v5e/v6e; 2 TCs (megacore / v7x) otherwise when detectable."""
    try:
        kind = jax.devices()[0].device_kind.lower()
    except Exception:
        return 1
    if "v5 lite" in kind or "v5e" in kind or "v6" in kind:
        return 1
    if "v4" in kind or "v5p" in kind or "v5 p" in kind or "v7" in kind or "7x" in kind:
        return 2
    return 1


def _pick_tile_b(B, num_tc, max_tile=4096):
    """Overhead-bound workload: one fat program per TensorCore; only split
    further when a single tile would get very large, never below 512 rows."""
    if num_tc > 1 and B % num_tc == 0 and (B // num_tc) % 8 == 0:
        t = B // num_tc
    else:
        t = B
    while t > max_tile and t % 2 == 0 and (t // 2) % 8 == 0 and (t // 2) >= 512:
        t //= 2
    return t


def transition_matrix_forward(state, params, *, activation=ACTIVATION,
                              compute_dtype=jnp.bfloat16, tile_b=None):
    """state: iterable of (B, d_i) float32 arrays (concatenated along -1, as in
    the PyTorch forward). params: list of (W [in, out], b [1, out]) for the 3
    Linear layers."""
    # torch.cat(state, dim=-1): a tiny (B, 32) array, built once per call.
    x = jnp.concatenate(list(state), axis=-1)
    B, in_dim = x.shape
    (w0, b0), (w1, b1), (w2, b2) = params
    assert w0.shape[0] == in_dim
    out_dim = w2.shape[1]

    num_tc = _num_tensorcores()
    if tile_b is None:
        tile_b = _pick_tile_b(B, num_tc)
    assert B % tile_b == 0 and (tile_b % 8 == 0 or tile_b == B)
    grid = (B // tile_b,)

    # bf16 matmul operands (halves weight DMA / doubles MXU rate on v6e/v7x);
    # biases stay f32 so bias-add/tanh remain f32 on every chip generation.
    w0c = w0.astype(compute_dtype)
    w1c = w1.astype(compute_dtype)
    w2c = w2.astype(compute_dtype)

    # Grid-invariant blocks -> weights/biases stay resident in VMEM.
    resident = lambda arr: pl.BlockSpec(arr.shape, lambda i: (0, 0))

    # Only raise the scoped-VMEM limit if a tile would actually need it
    # (relevant only when tile_b is scaled into many thousands of rows).
    est = 2 * tile_b * (in_dim + out_dim) * 4 + (2 << 20)
    vmem_limit = min(2 * est, 100 * 1024 * 1024) if est > 24 * 1024 * 1024 else None

    kernel = functools.partial(_mlp_kernel, activation=activation,
                               compute_dtype=compute_dtype)
    return pl.pallas_call(
        kernel,
        out_shape=jax.ShapeDtypeStruct((B, out_dim), x.dtype),
        grid=grid,
        in_specs=[
            pl.BlockSpec((tile_b, in_dim), lambda i: (i, 0)),   # activation tile
            resident(w0c), resident(b0),
            resident(w1c), resident(b1),
            resident(w2c), resident(b2),
        ],
        out_specs=pl.BlockSpec((tile_b, out_dim), lambda i: (i, 0)),
        compiler_params=pltpu.CompilerParams(
            dimension_semantics=("parallel",),
            vmem_limit_bytes=vmem_limit),
    )(x, w0c, b0, w1c, b1, w2c, b2)


# ----------------------------------------------------------------------------
# Deterministic parameter init (PyTorch-Linear-style uniform fan-in bounds)
# ----------------------------------------------------------------------------
def init_params(key, lsd, ltd, num_hidden, dtype=jnp.float32):
    dims = [lsd + ltd, *num_hidden, lsd * lsd]
    params = []
    for fan_in, fan_out in zip(dims[:-1], dims[1:]):
        key, kw, kb = jax.random.split(key, 3)
        bound = 1.0 / (fan_in ** 0.5)
        w = jax.random.uniform(kw, (fan_in, fan_out), dtype, -bound, bound)
        b = jax.random.uniform(kb, (1, fan_out), dtype, -bound, bound)
        params.append((w, b))
    # TODO(synk): the reference's `layers[-1].weight.copy(flip(0.2*eye).reshape(...))`
    # is shape-mismatched and not an in-place op in PyTorch (no-op / bug); the
    # intended ~0.2*flipped-identity init is left as random init here.
    return params


def reference_forward(x, params, activation=ACTIVATION, compute_dtype=jnp.bfloat16):
    """Pure-JAX reference on the same bf16-operand / f32-accumulate math path."""
    h = x
    n = len(params)
    for idx, (w, b) in enumerate(params):
        h = jnp.dot(h.astype(compute_dtype), w.astype(compute_dtype),
                    preferred_element_type=jnp.float32) + b
        if idx < n - 1:
            h = _act(h, activation)
    return h


if __name__ == "__main__":
    key = jax.random.PRNGKey(0)
    kp, ks, kc = jax.random.split(key, 3)

    params = init_params(kp, LSD, LTD, NUM_HIDDEN)

    # A rollout of T timesteps x per-step batch 8, collapsed into ONE
    # pallas_call (launch-overhead amortization).
    T, B_STEP = 32, 8
    B = T * B_STEP                                               # 256 rows
    state_part = jax.random.normal(ks, (B, LSD), jnp.float32)    # (256, 16)
    ctx_part = jax.random.normal(kc, (B, LTD), jnp.float32)      # (256, 16)

    out = transition_matrix_forward([state_part, ctx_part], params)
    out = jax.block_until_ready(out)

    x = jnp.concatenate([state_part, ctx_part], axis=-1)
    ref = reference_forward(x, params)

    assert out.shape == (B, OUT_DIM)
    assert jnp.allclose(out, ref, atol=1e-2, rtol=1e-2), \
        float(jnp.max(jnp.abs(out - ref)))

    print("KERNEL_OK")
</pallas_src>

<mosaic_0001>
module attributes {stable_mosaic.version = 11 : i64} {
  func.func @_mlp_kernel(%arg0: i32, %arg1: memref<256x32xf32, #tpu.memory_space<vmem>>, %arg2: memref<32x32xbf16, #tpu.memory_space<vmem>>, %arg3: memref<1x32xf32, #tpu.memory_space<vmem>>, %arg4: memref<32x32xbf16, #tpu.memory_space<vmem>>, %arg5: memref<1x32xf32, #tpu.memory_space<vmem>>, %arg6: memref<32x256xbf16, #tpu.memory_space<vmem>>, %arg7: memref<1x256xf32, #tpu.memory_space<vmem>>, %arg8: memref<256x256xf32, #tpu.memory_space<vmem>>) attributes {dimension_semantics = [#tpu.dimension_semantics<parallel>], iteration_bounds = array<i64: 1>, scalar_prefetch = 0 : i64, scratch_operands = 0 : i64, tpu.core_type = #tpu.core_type<tc>, window_params = [{transform_indices = @transform_0, window_bounds = array<i64: 256, 32>}, {pipeline_mode = #tpu.pipeline_mode<synchronous>, transform_indices = @transform_1, window_bounds = array<i64: 32, 32>}, {pipeline_mode = #tpu.pipeline_mode<synchronous>, transform_indices = @transform_2, window_bounds = array<i64: 1, 32>}, {pipeline_mode = #tpu.pipeline_mode<synchronous>, transform_indices = @transform_3, window_bounds = array<i64: 32, 32>}, {pipeline_mode = #tpu.pipeline_mode<synchronous>, transform_indices = @transform_4, window_bounds = array<i64: 1, 32>}, {pipeline_mode = #tpu.pipeline_mode<synchronous>, transform_indices = @transform_5, window_bounds = array<i64: 32, 256>}, {pipeline_mode = #tpu.pipeline_mode<synchronous>, transform_indices = @transform_6, window_bounds = array<i64: 1, 256>}, {transform_indices = @transform_7, window_bounds = array<i64: 256, 256>}]} {
    %c0 = arith.constant 0 : index
    %c0_0 = arith.constant 0 : index
    %0 = vector.load %arg1[%c0, %c0_0] : memref<256x32xf32, #tpu.memory_space<vmem>>, vector<256x32xf32>
    %1 = arith.truncf %0 : vector<256x32xf32> to vector<256x32xbf16>
    %c0_1 = arith.constant 0 : index
    %c0_2 = arith.constant 0 : index
    %2 = vector.load %arg2[%c0_1, %c0_2] : memref<32x32xbf16, #tpu.memory_space<vmem>>, vector<32x32xbf16>
    %cst = arith.constant dense<0.000000e+00> : vector<256x32xf32>
    %3 = tpu.matmul %1, %2, %cst {dimension_numbers = #tpu.dot_dimension_numbers<[1], [0], [0], [1], [0, 0, 1, 1], [], []>} : vector<256x32xbf16>, vector<32x32xbf16>, vector<256x32xf32> -> vector<256x32xf32>
    %c0_3 = arith.constant 0 : index
    %c0_4 = arith.constant 0 : index
    %4 = vector.load %arg3[%c0_3, %c0_4] : memref<1x32xf32, #tpu.memory_space<vmem>>, vector<1x32xf32>
    %5 = vector.broadcast %4 : vector<1x32xf32> to vector<256x32xf32>
    %6 = arith.addf %3, %5 : vector<256x32xf32>
    %7 = math.tanh %6 : vector<256x32xf32>
    %8 = arith.truncf %7 : vector<256x32xf32> to vector<256x32xbf16>
    %c0_5 = arith.constant 0 : index
    %c0_6 = arith.constant 0 : index
    %9 = vector.load %arg4[%c0_5, %c0_6] : memref<32x32xbf16, #tpu.memory_space<vmem>>, vector<32x32xbf16>
    %cst_7 = arith.constant dense<0.000000e+00> : vector<256x32xf32>
    %10 = tpu.matmul %8, %9, %cst_7 {dimension_numbers = #tpu.dot_dimension_numbers<[1], [0], [0], [1], [0, 0, 1, 1], [], []>} : vector<256x32xbf16>, vector<32x32xbf16>, vector<256x32xf32> -> vector<256x32xf32>
    %c0_8 = arith.constant 0 : index
    %c0_9 = arith.constant 0 : index
    %11 = vector.load %arg5[%c0_8, %c0_9] : memref<1x32xf32, #tpu.memory_space<vmem>>, vector<1x32xf32>
    %12 = vector.broadcast %11 : vector<1x32xf32> to vector<256x32xf32>
    %13 = arith.addf %10, %12 : vector<256x32xf32>
    %14 = math.tanh %13 : vector<256x32xf32>
    %15 = arith.truncf %14 : vector<256x32xf32> to vector<256x32xbf16>
    %c0_10 = arith.constant 0 : index
    %c0_11 = arith.constant 0 : index
    %16 = vector.load %arg6[%c0_10, %c0_11] : memref<32x256xbf16, #tpu.memory_space<vmem>>, vector<32x256xbf16>
    %cst_12 = arith.constant dense<0.000000e+00> : vector<256x256xf32>
    %17 = tpu.matmul %15, %16, %cst_12 {dimension_numbers = #tpu.dot_dimension_numbers<[1], [0], [0], [1], [0, 0, 1, 1], [], []>} : vector<256x32xbf16>, vector<32x256xbf16>, vector<256x256xf32> -> vector<256x256xf32>
    %c0_13 = arith.constant 0 : index
    %c0_14 = arith.constant 0 : index
    %18 = vector.load %arg7[%c0_13, %c0_14] : memref<1x256xf32, #tpu.memory_space<vmem>>, vector<1x256xf32>
    %19 = vector.broadcast %18 : vector<1x256xf32> to vector<256x256xf32>
    %20 = arith.addf %17, %19 : vector<256x256xf32>
    %c0_15 = arith.constant 0 : index
    %c0_16 = arith.constant 0 : index
    %21 = vector.load %arg8[%c0_15, %c0_16] : memref<256x256xf32, #tpu.memory_space<vmem>>, vector<256x256xf32>
    tpu.vector_store %arg8[%c0_15, %c0_16], %20 {strides = array<i32>} : memref<256x256xf32, #tpu.memory_space<vmem>>, vector<256x256xf32>,
    return
  }
  func.func @transform_0(%arg0: i32) -> (i32, i32) {
    %c0_i32 = arith.constant 0 : i32
    %c0_i32_0 = arith.constant 0 : i32
    return %arg0, %c0_i32 : i32, i32
  }
  func.func @transform_1(%arg0: i32) -> (i32, i32) {
    %c0_i32 = arith.constant 0 : i32
    %c0_i32_0 = arith.constant 0 : i32
    %c0_i32_1 = arith.constant 0 : i32
    return %c0_i32, %c0_i32_0 : i32, i32
  }
  func.func @transform_2(%arg0: i32) -> (i32, i32) {
    %c0_i32 = arith.constant 0 : i32
    %c0_i32_0 = arith.constant 0 : i32
    %c0_i32_1 = arith.constant 0 : i32
    return %c0_i32, %c0_i32_0 : i32, i32
  }
  func.func @transform_3(%arg0: i32) -> (i32, i32) {
    %c0_i32 = arith.constant 0 : i32
    %c0_i32_0 = arith.constant 0 : i32
    %c0_i32_1 = arith.constant 0 : i32
    return %c0_i32, %c0_i32_0 : i32, i32
  }
  func.func @transform_4(%arg0: i32) -> (i32, i32) {
    %c0_i32 = arith.constant 0 : i32
    %c0_i32_0 = arith.constant 0 : i32
    %c0_i32_1 = arith.constant 0 : i32
    return %c0_i32, %c0_i32_0 : i32, i32
  }
  func.func @transform_5(%arg0: i32) -> (i32, i32) {
    %c0_i32 = arith.constant 0 : i32
    %c0_i32_0 = arith.constant 0 : i32
    %c0_i32_1 = arith.constant 0 : i32
    return %c0_i32, %c0_i32_0 : i32, i32
  }
  func.func @transform_6(%arg0: i32) -> (i32, i32) {
    %c0_i32 = arith.constant 0 : i32
    %c0_i32_0 = arith.constant 0 : i32
    %c0_i32_1 = arith.constant 0 : i32
    return %c0_i32, %c0_i32_0 : i32, i32
  }
  func.func @transform_7(%arg0: i32) -> (i32, i32) {
    %c0_i32 = arith.constant 0 : i32
    %c0_i32_0 = arith.constant 0 : i32
    return %arg0, %c0_i32 : i32, i32
  }
}

</mosaic_0001>

<llo_original>
// kernel: tpu_custom_call.1
$region0: #{tpu_custom_call.1}
  #allocation0 [shape = 'u32[]', space=smem, size = 0x4, offset = 0x4, fixed_abs, tag = 'smem constant byte address 0x4 - core index']
  #allocation1 [shape = 'u32[144,128]{1,0:T(1,128)}', space=vmem, size = 0x12000, scoped, tag = 'internal scratch']
  %s0 = inlined_call_operand.vmem [shape: f32[256,32], index: 0, kind: input, shape index: {}]
  %s1 = inlined_call_operand.vmem [shape: bf16[32,32], index: 1, kind: input, shape index: {}]
  %s2 = inlined_call_operand.vmem [shape: f32[1,32], index: 2, kind: input, shape index: {}]
  %s3 = inlined_call_operand.vmem [shape: bf16[32,32], index: 3, kind: input, shape index: {}]
  %s4 = inlined_call_operand.vmem [shape: f32[1,32], index: 4, kind: input, shape index: {}]
  %s5 = inlined_call_operand.vmem [shape: bf16[32,256], index: 5, kind: input, shape index: {}]
  %s6 = inlined_call_operand.vmem [shape: f32[1,256], index: 6, kind: input, shape index: {}]
  %s7 = inlined_call_operand.hbm [shape: f32[256,256], index: 7, kind: output, shape index: {}]
  %s8 = sld [smem:[#allocation0]]
  $region38: #{tpu_custom_call.1} parent=0
    _
  %s10 = ssub.s32 1, %s8
  %s11 = scalar_select 0, %s10, %s8
  $region1: #{tpu_custom_call.1} parent=0
    #allocation2 [shape = 'u8[262144]{0}', space=vmem, size = 0x40000, scoped, tag = 'output window, operand 0, single buffered']
    #allocation3 [shape = 's32[1]{0}', space=sflag, size = 0x4, scoped, tag = 'scoped memory for tpu_custom_call.1']
    %12 = vsyncpa [#allocation3], 0
    // Predicated region
    $region2: #{tpu_custom_call.1} parent=1 // pred_check
      _
    $region3: #{tpu_custom_call.1} parent=1 // pred_check_branch
      %14 = sbr.rel (0) target = $region5
    $region4: #{tpu_custom_call.1} parent=1 // pred_region
      _
    $region5: #{tpu_custom_call.1} parent=1 // pred_fallthru
      _
    // Predicated region
    $region6: #{tpu_custom_call.1} parent=1 // pred_check
      _
    $region7: #{tpu_custom_call.1} parent=1 // pred_check_branch
      %16 = sbr.rel (0) target = $region9
    $region8: #{tpu_custom_call.1} parent=1 // pred_region
      _
    $region9: #{tpu_custom_call.1} parent=1 // pred_fallthru
      _
    // Predicated region
    $region10: #{tpu_custom_call.1} parent=1 // pred_check
      _
    $region11: #{tpu_custom_call.1} parent=1 // pred_check_branch
      %18 = sbr.rel (0) target = $region13
    $region12: #{tpu_custom_call.1} parent=1 // pred_region
      _
    $region13: #{tpu_custom_call.1} parent=1 // pred_fallthru
      _
    // Predicated region
    $region14: #{tpu_custom_call.1} parent=1 // pred_check
      _
    $region15: #{tpu_custom_call.1} parent=1 // pred_check_branch
      %20 = sbr.rel (0) target = $region17
    $region16: #{tpu_custom_call.1} parent=1 // pred_region
      _
    $region17: #{tpu_custom_call.1} parent=1 // pred_fallthru
      _
    // Predicated region
    $region18: #{tpu_custom_call.1} parent=1 // pred_check
      _
    $region19: #{tpu_custom_call.1} parent=1 // pred_check_branch
      %22 = sbr.rel (0) target = $region21
    $region20: #{tpu_custom_call.1} parent=1 // pred_region
      _
    $region21: #{tpu_custom_call.1} parent=1 // pred_fallthru
      _
    // Predicated region
    $region22: #{tpu_custom_call.1} parent=1 // pred_check
      _
    $region23: #{tpu_custom_call.1} parent=1 // pred_check_branch
      %24 = sbr.rel (0) target = $region25
    $region24: #{tpu_custom_call.1} parent=1 // pred_region
      _
    $region25: #{tpu_custom_call.1} parent=1 // pred_fallthru
      _
    // Predicated region
    $region26: #{tpu_custom_call.1} parent=1 // pred_check
      _
    $region27: #{tpu_custom_call.1} parent=1 // pred_check_branch
      %26 = sbr.rel (0) target = $region29
    $region28: #{tpu_custom_call.1} parent=1 // pred_region
      _
    $region29: #{tpu_custom_call.1} parent=1 // pred_fallthru
      _
    %v28 = vld [vmem:[%s0] sm:$0xff]
    %v29 = vld [vmem:[%s0 + $0x8] sm:$0xff]
    %v30 = vld [vmem:[%s0 + $0x10] sm:$0xff]
    %v31 = vld [vmem:[%s0 + $0x18] sm:$0xff]
    %v32 = vld [vmem:[%s0 + $0x20] sm:$0xff]
    %v33 = vld [vmem:[%s0 + $0x28] sm:$0xff]
    %v34 = vld [vmem:[%s0 + $0x30] sm:$0xff]
    %v35 = vld [vmem:[%s0 + $0x38] sm:$0xff]
    %v36 = vld [vmem:[%s0 + $0x40] sm:$0xff]
    %v37 = vld [vmem:[%s0 + $0x48] sm:$0xff]
    %v38 = vld [vmem:[%s0 + $0x50] sm:$0xff]
    %v39 = vld [vmem:[%s0 + $0x58] sm:$0xff]
    %v40 = vld [vmem:[%s0 + $0x60] sm:$0xff]
    %v41 = vld [vmem:[%s0 + $0x68] sm:$0xff]
    %v42 = vld [vmem:[%s0 + $0x70] sm:$0xff]
    %v43 = vld [vmem:[%s0 + $0x78] sm:$0xff]
    %v44 = vld [vmem:[%s0 + $0x80] sm:$0xff]
    %v45 = vld [vmem:[%s0 + $0x88] sm:$0xff]
    %v46 = vld [vmem:[%s0 + $0x90] sm:$0xff]
    %v47 = vld [vmem:[%s0 + $0x98] sm:$0xff]
    %v48 = vld [vmem:[%s0 + $0xa0] sm:$0xff]
    %v49 = vld [vmem:[%s0 + $0xa8] sm:$0xff]
    %v50 = vld [vmem:[%s0 + $0xb0] sm:$0xff]
    %v51 = vld [vmem:[%s0 + $0xb8] sm:$0xff]
    %v52 = vld [vmem:[%s0 + $0xc0] sm:$0xff]
    %v53 = vld [vmem:[%s0 + $0xc8] sm:$0xff]
    %v54 = vld [vmem:[%s0 + $0xd0] sm:$0xff]
    %v55 = vld [vmem:[%s0 + $0xd8] sm:$0xff]
    %v56 = vld [vmem:[%s0 + $0xe0] sm:$0xff]
    %v57 = vld [vmem:[%s0 + $0xe8] sm:$0xff]
    %v58 = vld [vmem:[%s0 + $0xf0] sm:$0xff]
    %v59 = vld [vmem:[%s0 + $0xf8] sm:$0xff]
    %v60 = vpack.c.bf16 %v29, %v28
    %v61 = vpack.c.bf16 %v31, %v30
    %v62 = vpack.c.bf16 %v33, %v32
    %v63 = vpack.c.bf16 %v35, %v34
    %v64 = vpack.c.bf16 %v37, %v36
    %v65 = vpack.c.bf16 %v39, %v38
    %v66 = vpack.c.bf16 %v41, %v40
    %v67 = vpack.c.bf16 %v43, %v42
    %v68 = vpack.c.bf16 %v45, %v44
    %v69 = vpack.c.bf16 %v47, %v46
    %v70 = vpack.c.bf16 %v49, %v48
    %v71 = vpack.c.bf16 %v51, %v50
    %v72 = vpack.c.bf16 %v53, %v52
    %v73 = vpack.c.bf16 %v55, %v54
    %v74 = vpack.c.bf16 %v57, %v56
    %v75 = vpack.c.bf16 %v59, %v58
    %v76 = vld [vmem:[%s1] sm:$0xf]
    %v77 = vld [vmem:[%s1 + $0x4] sm:$0xf]
    %v78 = vld [vmem:[%s1 + $0x8] sm:$0xf]
    %v79 = vld [vmem:[%s1 + $0xc] sm:$0xf]
    %v80 = vld [vmem:[%s2] sm:$0x1]
    %v82 = vlaneseq
    %v83 = vshrl.u32 %v82, 7
    %v84 = vsub.s32 0, %v83
    %v85 = vrot.slane %v80, %v84
    %v91 = vunpack.c.l.b16 %v76
    %v92 = vunpack.c.l.b16 %v77
    %v93 = vunpack.c.l.b16 %v78
    %v94 = vunpack.c.l.b16 %v79
    %v95 = vpack.c.b16 %v92, %v91
    %v96 = vpack.c.b16 %v94, %v93
    %vm99 = vcmask 261120
    %v101 = vsel %vm99, %v60, 0
    %v104 = vsel %vm99, %v61, 0
    %v107 = vsel %vm99, %v62, 0
    %v110 = vsel %vm99, %v63, 0
    %v113 = vsel %vm99, %v64, 0
    %v116 = vsel %vm99, %v65, 0
    %v119 = vsel %vm99, %v66, 0
    %v122 = vsel %vm99, %v67, 0
    %v125 = vsel %vm99, %v68, 0
    %v128 = vsel %vm99, %v69, 0
    %v131 = vsel %vm99, %v70, 0
    %v134 = vsel %vm99, %v71, 0
    %v137 = vsel %vm99, %v72, 0
    %v140 = vsel %vm99, %v73, 0
    %v143 = vsel %vm99, %v74, 0
    %v146 = vsel %vm99, %v75, 0
    %148 = vmatprep.subr.bf16.mxu0 0
    %149 = vmatpush1.bf16.msra.mxu0 %v95
    %150 = vmatprep.subr.bf16.mxu0 0
    %151 = vmatpush1.bf16.msra.mxu0 %v96
    %152 = vmatprep.subr.bf16.mxu0 0
    %153 = vmatpush1.bf16.msra.mxu0 0
    %154 = vmatprep.subr.bf16.mxu0 0
    %155 = vmatpush1.bf16.msra.mxu0 0
    %156 = vmatprep.subr.bf16.mxu0 0
    %157 = vmatpush1.bf16.msra.mxu0 0
    %158 = vmatprep.subr.bf16.mxu0 0
    %159 = vmatpush1.bf16.msra.mxu0 0
    %160 = vmatprep.subr.bf16.mxu0 0
    %161 = vmatpush1.bf16.msra.mxu0 0
    %162 = vmatprep.subr.bf16.mxu0 0
    %163 = vmatpush1.bf16.msra.mxu0 0
    %164 = vmatprep.subr.bf16.mxu0 0
    %165 = vmatpush1.bf16.msra.mxu0 0
    %166 = vmatprep.subr.bf16.mxu0 0
    %167 = vmatpush1.bf16.msra.mxu0 0
    %168 = vmatprep.subr.bf16.mxu0 0
    %169 = vmatpush1.bf16.msra.mxu0 0
    %170 = vmatprep.subr.bf16.mxu0 0
    %171 = vmatpush1.bf16.msra.mxu0 0
    %172 = vmatprep.subr.bf16.mxu0 0
    %173 = vmatpush1.bf16.msra.mxu0 0
    %174 = vmatprep.subr.bf16.mxu0 0
    %175 = vmatpush1.bf16.msra.mxu0 0
    %176 = vmatprep.subr.bf16.mxu0 0
    %177 = vmatpush1.bf16.msra.mxu0 0
    %178 = vmatprep.subr.bf16.mxu0 0
    %179 = vmatpush1.bf16.msra.mxu0 0
    %180 = vmatprep.mubr.bf16.mxu0 0
    %181 = vmatmul.mubr.bf16.gmra.mrb[0].mxu0 %v101
    %v182 = vpop.f32.mrb[0].mxu0
    %v183 = vadd.f32 %v85, %v182
    %v184 = vpop.f32.mrb[0].mxu0
    %v185 = vpop.f32.mrb[0].mxu0
    %v186 = vadd.f32 %v85, %v185
    %v187 = vpop.f32.mrb[0].mxu0
    %188 = vmatprep.mubr.bf16.mxu0 0
    %189 = vmatmul.mubr.bf16.gmra.mrb[0].mxu0 %v104
    %v190 = vpop.f32.mrb[0].mxu0
    %v191 = vadd.f32 %v85, %v190
    %v192 = vpop.f32.mrb[0].mxu0
    %v193 = vpop.f32.mrb[0].mxu0
    %v194 = vadd.f32 %v85, %v193
    %v195 = vpop.f32.mrb[0].mxu0
    %196 = vmatprep.mubr.bf16.mxu0 0
    %197 = vmatmul.mubr.bf16.gmra.mrb[0].mxu0 %v107
    %v198 = vpop.f32.mrb[0].mxu0
    %v199 = vadd.f32 %v85, %v198
    %v200 = vpop.f32.mrb[0].mxu0
    %v201 = vpop.f32.mrb[0].mxu0
    %v202 = vadd.f32 %v85, %v201
    %v203 = vpop.f32.mrb[0].mxu0
    %204 = vmatprep.mubr.bf16.mxu0 0
    %205 = vmatmul.mubr.bf16.gmra.mrb[0].mxu0 %v110
    %v206 = vpop.f32.mrb[0].mxu0
    %v207 = vadd.f32 %v85, %v206
    %v208 = vpop.f32.mrb[0].mxu0
    %v209 = vpop.f32.mrb[0].mxu0
    %v210 = vadd.f32 %v85, %v209
    %v211 = vpop.f32.mrb[0].mxu0
    %212 = vmatprep.mubr.bf16.mxu0 0
    %213 = vmatmul.mubr.bf16.gmra.mrb[0].mxu0 %v113
    %v214 = vpop.f32.mrb[0].mxu0
    %v215 = vadd.f32 %v85, %v214
    %v216 = vpop.f32.mrb[0].mxu0
    %v217 = vpop.f32.mrb[0].mxu0
    %v218 = vadd.f32 %v85, %v217
    %v219 = vpop.f32.mrb[0].mxu0
    %220 = vmatprep.mubr.bf16.mxu0 0
    %221 = vmatmul.mubr.bf16.gmra.mrb[0].mxu0 %v116
    %v222 = vpop.f32.mrb[0].mxu0
    %v223 = vadd.f32 %v85, %v222
    %v224 = vpop.f32.mrb[0].mxu0
    %v225 = vpop.f32.mrb[0].mxu0
    %v226 = vadd.f32 %v85, %v225
    %v227 = vpop.f32.mrb[0].mxu0
    %228 = vmatprep.mubr.bf16.mxu0 0
    %229 = vmatmul.mubr.bf16.gmra.mrb[0].mxu0 %v119
    %v230 = vpop.f32.mrb[0].mxu0
    %v231 = vadd.f32 %v85, %v230
    %v232 = vpop.f32.mrb[0].mxu0
    %v233 = vpop.f32.mrb[0].mxu0
    %v234 = vadd.f32 %v85, %v233
    %v235 = vpop.f32.mrb[0].mxu0
    %236 = vmatprep.mubr.bf16.mxu0 0
    %237 = vmatmul.mubr.bf16.gmra.mrb[0].mxu0 %v122
    %v238 = vpop.f32.mrb[0].mxu0
    %v239 = vadd.f32 %v85, %v238
    %v240 = vpop.f32.mrb[0].mxu0
    %v241 = vpop.f32.mrb[0].mxu0
    %v242 = vadd.f32 %v85, %v241
    %v243 = vpop.f32.mrb[0].mxu0
    %244 = vmatprep.mubr.bf16.mxu0 0
    %245 = vmatmul.mubr.bf16.gmra.mrb[0].mxu0 %v125
    %v246 = vpop.f32.mrb[0].mxu0
    %v247 = vadd.f32 %v85, %v246
    %v248 = vpop.f32.mrb[0].mxu0
    %v249 = vpop.f32.mrb[0].mxu0
    %v250 = vadd.f32 %v85, %v249
    %v251 = vpop.f32.mrb[0].mxu0
    %252 = vmatprep.mubr.bf16.mxu0 0
    %253 = vmatmul.mubr.bf16.gmra.mrb[0].mxu0 %v128
    %v254 = vpop.f32.mrb[0].mxu0
    %v255 = vadd.f32 %v85, %v254
    %v256 = vpop.f32.mrb[0].mxu0
    %v257 = vpop.f32.mrb[0].mxu0
    %v258 = vadd.f32 %v85, %v257
    %v259 = vpop.f32.mrb[0].mxu0
    %260 = vmatprep.mubr.bf16.mxu0 0
    %261 = vmatmul.mubr.bf16.gmra.mrb[0].mxu0 %v131
    %v262 = vpop.f32.mrb[0].mxu0
    %v263 = vadd.f32 %v85, %v262
    %v264 = vpop.f32.mrb[0].mxu0
    %v265 = vpop.f32.mrb[0].mxu0
    %v266 = vadd.f32 %v85, %v265
    %v267 = vpop.f32.mrb[0].mxu0
    %268 = vmatprep.mubr.bf16.mxu0 0
    %269 = vmatmul.mubr.bf16.gmra.mrb[0].mxu0 %v134
    %v270 = vpop.f32.mrb[0].mxu0
    %v271 = vadd.f32 %v85, %v270
    %v272 = vpop.f32.mrb[0].mxu0
    %v273 = vpop.f32.mrb[0].mxu0
    %v274 = vadd.f32 %v85, %v273
    %v275 = vpop.f32.mrb[0].mxu0
    %276 = vmatprep.mubr.bf16.mxu0 0
    %277 = vmatmul.mubr.bf16.gmra.mrb[0].mxu0 %v137
    %v278 = vpop.f32.mrb[0].mxu0
    %v279 = vadd.f32 %v85, %v278
    %v280 = vpop.f32.mrb[0].mxu0
    %v281 = vpop.f32.mrb[0].mxu0
    %v282 = vadd.f32 %v85, %v281
    %v283 = vpop.f32.mrb[0].mxu0
    %284 = vmatprep.mubr.bf16.mxu0 0
    %285 = vmatmul.mubr.bf16.gmra.mrb[0].mxu0 %v140
    %v286 = vpop.f32.mrb[0].mxu0
    %v287 = vadd.f32 %v85, %v286
    %v288 = vpop.f32.mrb[0].mxu0
    %v289 = vpop.f32.mrb[0].mxu0
    %v290 = vadd.f32 %v85, %v289
    %v291 = vpop.f32.mrb[0].mxu0
    %292 = vmatprep.mubr.bf16.mxu0 0
    %293 = vmatmul.mubr.bf16.gmra.mrb[0].mxu0 %v143
    %v294 = vpop.f32.mrb[0].mxu0
    %v295 = vadd.f32 %v85, %v294
    %v296 = vpop.f32.mrb[0].mxu0
    %v297 = vpop.f32.mrb[0].mxu0
    %v298 = vadd.f32 %v85, %v297
    %v299 = vpop.f32.mrb[0].mxu0
    %300 = vmatprep.mubr.bf16.mxu0 0
    %301 = vmatmul.mubr.bf16.gmra.mrb[0].mxu0 %v146
    %v302 = vpop.f32.mrb[0].mxu0
    %v303 = vadd.f32 %v85, %v302
    %v304 = vpop.f32.mrb[0].mxu0
    %v305 = vpop.f32.mrb[0].mxu0
    %v306 = vadd.f32 %v85, %v305
    %v307 = vpop.f32.mrb[0].mxu0
    %308 = vdwg.mxu0
    %v309 = vtanh.pop %v183
    %v310 = vtanh.pop %v186
    %v311 = vtanh.pop %v191
    %v312 = vtanh.pop %v194
    %v313 = vtanh.pop %v199
    %v314 = vtanh.pop %v202
    %v315 = vtanh.pop %v207
    %v316 = vtanh.pop %v210
    %v317 = vtanh.pop %v215
    %v318 = vtanh.pop %v218
    %v319 = vtanh.pop %v223
    %v320 = vtanh.pop %v226
    %v321 = vtanh.pop %v231
    %v322 = vtanh.pop %v234
    %v323 = vtanh.pop %v239
    %v324 = vtanh.pop %v242
    %v325 = vtanh.pop %v247
    %v326 = vtanh.pop %v250
    %v327 = vtanh.pop %v255
    %v328 = vtanh.pop %v258
    %v329 = vtanh.pop %v263
    %v330 = vtanh.pop %v266
    %v331 = vtanh.pop %v271
    %v332 = vtanh.pop %v274
    %v333 = vtanh.pop %v279
    %v334 = vtanh.pop %v282
    %v335 = vtanh.pop %v287
    %v336 = vtanh.pop %v290
    %v337 = vtanh.pop %v295
    %v338 = vtanh.pop %v298
    %v339 = vtanh.pop %v303
    %v340 = vtanh.pop %v306
    %v341 = vpack.c.bf16 %v310, %v309
    %v342 = vpack.c.bf16 %v312, %v311
    %v343 = vpack.c.bf16 %v314, %v313
    %v344 = vpack.c.bf16 %v316, %v315
    %v345 = vpack.c.bf16 %v318, %v317
    %v346 = vpack.c.bf16 %v320, %v319
    %v347 = vpack.c.bf16 %v322, %v321
    %v348 = vpack.c.bf16 %v324, %v323
    %v349 = vpack.c.bf16 %v326, %v325
    %v350 = vpack.c.bf16 %v328, %v327
    %v351 = vpack.c.bf16 %v330, %v329
    %v352 = vpack.c.bf16 %v332, %v331
    %v353 = vpack.c.bf16 %v334, %v333
    %v354 = vpack.c.bf16 %v336, %v335
    %v355 = vpack.c.bf16 %v338, %v337
    %v356 = vpack.c.bf16 %v340, %v339
    %v357 = vld [vmem:[%s3] sm:$0xf]
    %v358 = vld [vmem:[%s3 + $0x4] sm:$0xf]
    %v359 = vld [vmem:[%s3 + $0x8] sm:$0xf]
    %v360 = vld [vmem:[%s3 + $0xc] sm:$0xf]
    %v361 = vld [vmem:[%s4] sm:$0x1]
    %v363 = vlaneseq
    %v364 = vshrl.u32 %v363, 7
    %v365 = vsub.s32 0, %v364
    %v366 = vrot.slane %v361, %v365
    %v372 = vunpack.c.l.b16 %v357
    %v373 = vunpack.c.l.b16 %v358
    %v374 = vunpack.c.l.b16 %v359
    %v375 = vunpack.c.l.b16 %v360
    %v376 = vpack.c.b16 %v373, %v372
    %v377 = vpack.c.b16 %v375, %v374
    %v381 = vsel %vm99, %v341, 0
    %v384 = vsel %vm99, %v342, 0
    %v387 = vsel %vm99, %v343, 0
    %v390 = vsel %vm99, %v344, 0
    %v393 = vsel %vm99, %v345, 0
    %v396 = vsel %vm99, %v346, 0
    %v399 = vsel %vm99, %v347, 0
    %v402 = vsel %vm99, %v348, 0
    %v405 = vsel %vm99, %v349, 0
    %v408 = vsel %vm99, %v350, 0
    %v411 = vsel %vm99, %v351, 0
    %v414 = vsel %vm99, %v352, 0
    %v417 = vsel %vm99, %v353, 0
    %v420 = vsel %vm99, %v354, 0
    %v423 = vsel %vm99, %v355, 0
    %v426 = vsel %vm99, %v356, 0
    %428 = vmatprep.subr.bf16.mxu0 0
    %429 = vmatpush1.bf16.msra.mxu0 %v376
    %430 = vmatprep.subr.bf16.mxu0 0
    %431 = vmatpush1.bf16.msra.mxu0 %v377
    %432 = vmatprep.subr.bf16.mxu0 0
    %433 = vmatpush1.bf16.msra.mxu0 0
    %434 = vmatprep.subr.bf16.mxu0 0
    %435 = vmatpush1.bf16.msra.mxu0 0
    %436 = vmatprep.subr.bf16.mxu0 0
    %437 = vmatpush1.bf16.msra.mxu0 0
    %438 = vmatprep.subr.bf16.mxu0 0
    %439 = vmatpush1.bf16.msra.mxu0 0
    %440 = vmatprep.subr.bf16.mxu0 0
    %441 = vmatpush1.bf16.msra.mxu0 0
    %442 = vmatprep.subr.bf16.mxu0 0
    %443 = vmatpush1.bf16.msra.mxu0 0
    %444 = vmatprep.subr.bf16.mxu0 0
    %445 = vmatpush1.bf16.msra.mxu0 0
    %446 = vmatprep.subr.bf16.mxu0 0
    %447 = vmatpush1.bf16.msra.mxu0 0
    %448 = vmatprep.subr.bf16.mxu0 0
    %449 = vmatpush1.bf16.msra.mxu0 0
    %450 = vmatprep.subr.bf16.mxu0 0
    %451 = vmatpush1.bf16.msra.mxu0 0
    %452 = vmatprep.subr.bf16.mxu0 0
    %453 = vmatpush1.bf16.msra.mxu0 0
    %454 = vmatprep.subr.bf16.mxu0 0
    %455 = vmatpush1.bf16.msra.mxu0 0
    %456 = vmatprep.subr.bf16.mxu0 0
    %457 = vmatpush1.bf16.msra.mxu0 0
    %458 = vmatprep.subr.bf16.mxu0 0
    %459 = vmatpush1.bf16.msra.mxu0 0
    %460 = vmatprep.mubr.bf16.mxu0 0
    %461 = vmatmul.mubr.bf16.gmra.mrb[0].mxu0 %v381
    %v462 = vpop.f32.mrb[0].mxu0
    %v463 = vadd.f32 %v366, %v462
    %v464 = vpop.f32.mrb[0].mxu0
    %v465 = vpop.f32.mrb[0].mxu0
    %v466 = vadd.f32 %v366, %v465
    %v467 = vpop.f32.mrb[0].mxu0
    %468 = vmatprep.mubr.bf16.mxu0 0
    %469 = vmatmul.mubr.bf16.gmra.mrb[0].mxu0 %v384
    %v470 = vpop.f32.mrb[0].mxu0
    %v471 = vadd.f32 %v366, %v470
    %v472 = vpop.f32.mrb[0].mxu0
    %v473 = vpop.f32.mrb[0].mxu0
    %v474 = vadd.f32 %v366, %v473
    %v475 = vpop.f32.mrb[0].mxu0
    %476 = vmatprep.mubr.bf16.mxu0 0
    %477 = vmatmul.mubr.bf16.gmra.mrb[0].mxu0 %v387
    %v478 = vpop.f32.mrb[0].mxu0
    %v479 = vadd.f32 %v366, %v478
    %v480 = vpop.f32.mrb[0].mxu0
    %v481 = vpop.f32.mrb[0].mxu0
    %v482 = vadd.f32 %v366, %v481
    %v483 = vpop.f32.mrb[0].mxu0
    %484 = vmatprep.mubr.bf16.mxu0 0
    %485 = vmatmul.mubr.bf16.gmra.mrb[0].mxu0 %v390
    %v486 = vpop.f32.mrb[0].mxu0
    %v487 = vadd.f32 %v366, %v486
    %v488 = vpop.f32.mrb[0].mxu0
    %v489 = vpop.f32.mrb[0].mxu0
    %v490 = vadd.f32 %v366, %v489
    %v491 = vpop.f32.mrb[0].mxu0
    %492 = vmatprep.mubr.bf16.mxu0 0
    %493 = vmatmul.mubr.bf16.gmra.mrb[0].mxu0 %v393
    %v494 = vpop.f32.mrb[0].mxu0
    %v495 = vadd.f32 %v366, %v494
    %v496 = vpop.f32.mrb[0].mxu0
    %v497 = vpop.f32.mrb[0].mxu0
    %v498 = vadd.f32 %v366, %v497
    %v499 = vpop.f32.mrb[0].mxu0
    %500 = vmatprep.mubr.bf16.mxu0 0
    %501 = vmatmul.mubr.bf16.gmra.mrb[0].mxu0 %v396
    %v502 = vpop.f32.mrb[0].mxu0
    %v503 = vadd.f32 %v366, %v502
    %v504 = vpop.f32.mrb[0].mxu0
    %v505 = vpop.f32.mrb[0].mxu0
    %v506 = vadd.f32 %v366, %v505
    %v507 = vpop.f32.mrb[0].mxu0
    %508 = vmatprep.mubr.bf16.mxu0 0
    %509 = vmatmul.mubr.bf16.gmra.mrb[0].mxu0 %v399
    %v510 = vpop.f32.mrb[0].mxu0
    %v511 = vadd.f32 %v366, %v510
    %v512 = vpop.f32.mrb[0].mxu0
    %v513 = vpop.f32.mrb[0].mxu0
    %v514 = vadd.f32 %v366, %v513
    %v515 = vpop.f32.mrb[0].mxu0
    %516 = vmatprep.mubr.bf16.mxu0 0
    %517 = vmatmul.mubr.bf16.gmra.mrb[0].mxu0 %v402
    %v518 = vpop.f32.mrb[0].mxu0
    %v519 = vadd.f32 %v366, %v518
    %v520 = vpop.f32.mrb[0].mxu0
    %v521 = vpop.f32.mrb[0].mxu0
    %v522 = vadd.f32 %v366, %v521
    %v523 = vpop.f32.mrb[0].mxu0
    %524 = vmatprep.mubr.bf16.mxu0 0
    %525 = vmatmul.mubr.bf16.gmra.mrb[0].mxu0 %v405
    %v526 = vpop.f32.mrb[0].mxu0
    %v527 = vadd.f32 %v366, %v526
    %v528 = vpop.f32.mrb[0].mxu0
    %v529 = vpop.f32.mrb[0].mxu0
    %v530 = vadd.f32 %v366, %v529
    %v531 = vpop.f32.mrb[0].mxu0
    %532 = vmatprep.mubr.bf16.mxu0 0
    %533 = vmatmul.mubr.bf16.gmra.mrb[0].mxu0 %v408
    %v534 = vpop.f32.mrb[0].mxu0
    %v535 = vadd.f32 %v366, %v534
    %v536 = vpop.f32.mrb[0].mxu0
    %v537 = vpop.f32.mrb[0].mxu0
    %v538 = vadd.f32 %v366, %v537
    %v539 = vpop.f32.mrb[0].mxu0
    %540 = vmatprep.mubr.bf16.mxu0 0
    %541 = vmatmul.mubr.bf16.gmra.mrb[0].mxu0 %v411
    %v542 = vpop.f32.mrb[0].mxu0
    %v543 = vadd.f32 %v366, %v542
    %v544 = vpop.f32.mrb[0].mxu0
    %v545 = vpop.f32.mrb[0].mxu0
    %v546 = vadd.f32 %v366, %v545
    %v547 = vpop.f32.mrb[0].mxu0
    %548 = vmatprep.mubr.bf16.mxu0 0
    %549 = vmatmul.mubr.bf16.gmra.mrb[0].mxu0 %v414
    %v550 = vpop.f32.mrb[0].mxu0
    %v551 = vadd.f32 %v366, %v550
    %v552 = vpop.f32.mrb[0].mxu0
    %v553 = vpop.f32.mrb[0].mxu0
    %v554 = vadd.f32 %v366, %v553
    %v555 = vpop.f32.mrb[0].mxu0
    %556 = vmatprep.mubr.bf16.mxu0 0
    %557 = vmatmul.mubr.bf16.gmra.mrb[0].mxu0 %v417
    %v558 = vpop.f32.mrb[0].mxu0
    %v559 = vadd.f32 %v366, %v558
    %v560 = vpop.f32.mrb[0].mxu0
    %v561 = vpop.f32.mrb[0].mxu0
    %v562 = vadd.f32 %v366, %v561
    %v563 = vpop.f32.mrb[0].mxu0
    %564 = vmatprep.mubr.bf16.mxu0 0
    %565 = vmatmul.mubr.bf16.gmra.mrb[0].mxu0 %v420
    %v566 = vpop.f32.mrb[0].mxu0
    %v567 = vadd.f32 %v366, %v566
    %v568 = vpop.f32.mrb[0].mxu0
    %v569 = vpop.f32.mrb[0].mxu0
    %v570 = vadd.f32 %v366, %v569
    %v571 = vpop.f32.mrb[0].mxu0
    %572 = vmatprep.mubr.bf16.mxu0 0
    %573 = vmatmul.mubr.bf16.gmra.mrb[0].mxu0 %v423
    %v574 = vpop.f32.mrb[0].mxu0
    %v575 = vadd.f32 %v366, %v574
    %v576 = vpop.f32.mrb[0].mxu0
    %v577 = vpop.f32.mrb[0].mxu0
    %v578 = vadd.f32 %v366, %v577
    %v579 = vpop.f32.mrb[0].mxu0
    %580 = vmatprep.mubr.bf16.mxu0 0
    %581 = vmatmul.mubr.bf16.gmra.mrb[0].mxu0 %v426
    %v582 = vpop.f32.mrb[0].mxu0
    %v583 = vadd.f32 %v366, %v582
    %v584 = vpop.f32.mrb[0].mxu0
    %v585 = vpop.f32.mrb[0].mxu0
    %v586 = vadd.f32 %v366, %v585
    %v587 = vpop.f32.mrb[0].mxu0
    %588 = vdwg.mxu0
    %v589 = vtanh.pop %v463
    %v590 = vtanh.pop %v466
    %v591 = vtanh.pop %v471
    %v592 = vtanh.pop %v474
    %v593 = vtanh.pop %v479
    %v594 = vtanh.pop %v482
    %v595 = vtanh.pop %v487
    %v596 = vtanh.pop %v490
    %v597 = vtanh.pop %v495
    %v598 = vtanh.pop %v498
    %v599 = vtanh.pop %v503
    %v600 = vtanh.pop %v506
    %v601 = vtanh.pop %v511
    %v602 = vtanh.pop %v514
    %v603 = vtanh.pop %v519
    %v604 = vtanh.pop %v522
    %v605 = vtanh.pop %v527
    %v606 = vtanh.pop %v530
    %v607 = vtanh.pop %v535
    %v608 = vtanh.pop %v538
    %v609 = vtanh.pop %v543
    %v610 = vtanh.pop %v546
    %v611 = vtanh.pop %v551
    %v612 = vtanh.pop %v554
    %v613 = vtanh.pop %v559
    %v614 = vtanh.pop %v562
    %v615 = vtanh.pop %v567
    %v616 = vtanh.pop %v570
    %v617 = vtanh.pop %v575
    %v618 = vtanh.pop %v578
    %v619 = vtanh.pop %v583
    %v620 = vtanh.pop %v586
    %v621 = vpack.c.bf16 %v590, %v589
    %v622 = vpack.c.bf16 %v592, %v591
    %v623 = vpack.c.bf16 %v594, %v593
    %v624 = vpack.c.bf16 %v596, %v595
    %v625 = vpack.c.bf16 %v598, %v597
    %v626 = vpack.c.bf16 %v600, %v599
    %v627 = vpack.c.bf16 %v602, %v601
    %v628 = vpack.c.bf16 %v604, %v603
    %v629 = vpack.c.bf16 %v606, %v605
    %v630 = vpack.c.bf16 %v608, %v607
    %v631 = vpack.c.bf16 %v610, %v609
    %v632 = vpack.c.bf16 %v612, %v611
    %v633 = vpack.c.bf16 %v614, %v613
    %v634 = vpack.c.bf16 %v616, %v615
    %v635 = vpack.c.bf16 %v618, %v617
    %v636 = vpack.c.bf16 %v620, %v619
    %v637 = vld [vmem:[%s5] sm:$0xff]
    %v638 = vld [vmem:[%s5 + $0x8] sm:$0xff]
    %v639 = vld [vmem:[%s5 + $0x10] sm:$0xff]
    %v640 = vld [vmem:[%s5 + $0x18] sm:$0xff]
    %v641 = vld [vmem:[%s6] sm:$0x3]
    %v643 = vlaneseq
    %v644 = vshrl.u32 %v643, 7
    %v645 = vsub.s32 0, %v644
    %v646 = vrot.slane %v641, %v645
    %v647 = vlaneseq
    %v648 = vshrl.u32 %v647, 7
    %v649 = vsub.s32 1, %v648
    %v650 = vrot.slane %v641, %v649
    %v657 = vunpack.c.l.b16 %v637
    %v658 = vunpack.c.h.b16 %v637
    %v659 = vunpack.c.l.b16 %v638
    %v660 = vunpack.c.h.b16 %v638
    %v661 = vunpack.c.l.b16 %v639
    %v662 = vunpack.c.h.b16 %v639
    %v663 = vunpack.c.l.b16 %v640
    %v664 = vunpack.c.h.b16 %v640
    %v665 = vpack.c.b16 %v659, %v657
    %v666 = vpack.c.b16 %v660, %v658
    %v667 = vpack.c.b16 %v663, %v661
    %v668 = vpack.c.b16 %v664, %v662
    %v674 = vsel %vm99, %v621, 0
    %v677 = vsel %vm99, %v622, 0
    %v680 = vsel %vm99, %v623, 0
    %v683 = vsel %vm99, %v624, 0
    %v686 = vsel %vm99, %v625, 0
    %v689 = vsel %vm99, %v626, 0
    %v692 = vsel %vm99, %v627, 0
    %v695 = vsel %vm99, %v628, 0
    %v698 = vsel %vm99, %v629, 0
    %v701 = vsel %vm99, %v630, 0
    %v704 = vsel %vm99, %v631, 0
    %v707 = vsel %vm99, %v632, 0
    %v710 = vsel %vm99, %v633, 0
    %v713 = vsel %vm99, %v634, 0
    %v716 = vsel %vm99, %v635, 0
    %v719 = vsel %vm99, %v636, 0
    %721 = vmatprep.subr.bf16.mxu0 %v666
    %722 = vmatpush1.bf16.msra.mxu0 %v665
    %723 = vmatprep.subr.bf16.mxu0 %v668
    %724 = vmatpush1.bf16.msra.mxu0 %v667
    %725 = vmatprep.subr.bf16.mxu0 0
    %726 = vmatpush1.bf16.msra.mxu0 0
    %727 = vmatprep.subr.bf16.mxu0 0
    %728 = vmatpush1.bf16.msra.mxu0 0
    %729 = vmatprep.subr.bf16.mxu0 0
    %730 = vmatpush1.bf16.msra.mxu0 0
    %731 = vmatprep.subr.bf16.mxu0 0
    %732 = vmatpush1.bf16.msra.mxu0 0
    %733 = vmatprep.subr.bf16.mxu0 0
    %734 = vmatpush1.bf16.msra.mxu0 0
    %735 = vmatprep.subr.bf16.mxu0 0
    %736 = vmatpush1.bf16.msra.mxu0 0
    %737 = vmatprep.subr.bf16.mxu0 0
    %738 = vmatpush1.bf16.msra.mxu0 0
    %739 = vmatprep.subr.bf16.mxu0 0
    %740 = vmatpush1.bf16.msra.mxu0 0
    %741 = vmatprep.subr.bf16.mxu0 0
    %742 = vmatpush1.bf16.msra.mxu0 0
    %743 = vmatprep.subr.bf16.mxu0 0
    %744 = vmatpush1.bf16.msra.mxu0 0
    %745 = vmatprep.subr.bf16.mxu0 0
    %746 = vmatpush1.bf16.msra.mxu0 0
    %747 = vmatprep.subr.bf16.mxu0 0
    %748 = vmatpush1.bf16.msra.mxu0 0
    %749 = vmatprep.subr.bf16.mxu0 0
    %750 = vmatpush1.bf16.msra.mxu0 0
    %751 = vmatprep.subr.bf16.mxu0 0
    %752 = vmatpush1.bf16.msra.mxu0 0
    %753 = vmatprep.mubr.bf16.mxu0 0
    %754 = vmatmul.mubr.bf16.gmra.mrb[0].mxu0 %v674
    %v755 = vpop.f32.mrb[0].mxu0
    %v756 = vadd.f32 %v646, %v755
    %v757 = vpop.f32.mrb[0].mxu0
    %v758 = vadd.f32 %v650, %v757
    %v759 = vpop.f32.mrb[0].mxu0
    %v760 = vadd.f32 %v646, %v759
    %v761 = vpop.f32.mrb[0].mxu0
    %v762 = vadd.f32 %v650, %v761
    %763 = vmatprep.mubr.bf16.mxu0 0
    %764 = vmatmul.mubr.bf16.gmra.mrb[0].mxu0 %v677
    %v765 = vpop.f32.mrb[0].mxu0
    %v766 = vadd.f32 %v646, %v765
    %v767 = vpop.f32.mrb[0].mxu0
    %v768 = vadd.f32 %v650, %v767
    %v769 = vpop.f32.mrb[0].mxu0
    %v770 = vadd.f32 %v646, %v769
    %v771 = vpop.f32.mrb[0].mxu0
    %v772 = vadd.f32 %v650, %v771
    %773 = vmatprep.mubr.bf16.mxu0 0
    %774 = vmatmul.mubr.bf16.gmra.mrb[0].mxu0 %v680
    %v775 = vpop.f32.mrb[0].mxu0
    %v776 = vadd.f32 %v646, %v775
    %v777 = vpop.f32.mrb[0].mxu0
    %v778 = vadd.f32 %v650, %v777
    %v779 = vpop.f32.mrb[0].mxu0
    %v780 = vadd.f32 %v646, %v779
    %v781 = vpop.f32.mrb[0].mxu0
    %v782 = vadd.f32 %v650, %v781
    %783 = vmatprep.mubr.bf16.mxu0 0
    %784 = vmatmul.mubr.bf16.gmra.mrb[0].mxu0 %v683
    %v785 = vpop.f32.mrb[0].mxu0
    %v786 = vadd.f32 %v646, %v785
    %v787 = vpop.f32.mrb[0].mxu0
    %v788 = vadd.f32 %v650, %v787
    %v789 = vpop.f32.mrb[0].mxu0
    %v790 = vadd.f32 %v646, %v789
    %v791 = vpop.f32.mrb[0].mxu0
    %v792 = vadd.f32 %v650, %v791
    %793 = vmatprep.mubr.bf16.mxu0 0
    %794 = vmatmul.mubr.bf16.gmra.mrb[0].mxu0 %v686
    %v795 = vpop.f32.mrb[0].mxu0
    %v796 = vadd.f32 %v646, %v795
    %v797 = vpop.f32.mrb[0].mxu0
    %v798 = vadd.f32 %v650, %v797
    %v799 = vpop.f32.mrb[0].mxu0
    %v800 = vadd.f32 %v646, %v799
    %v801 = vpop.f32.mrb[0].mxu0
    %v802 = vadd.f32 %v650, %v801
    %803 = vmatprep.mubr.bf16.mxu0 0
    %804 = vmatmul.mubr.bf16.gmra.mrb[0].mxu0 %v689
    %v805 = vpop.f32.mrb[0].mxu0
    %v806 = vadd.f32 %v646, %v805
    %v807 = vpop.f32.mrb[0].mxu0
    %v808 = vadd.f32 %v650, %v807
    %v809 = vpop.f32.mrb[0].mxu0
    %v810 = vadd.f32 %v646, %v809
    %v811 = vpop.f32.mrb[0].mxu0
    %v812 = vadd.f32 %v650, %v811
    %813 = vmatprep.mubr.bf16.mxu0 0
    %814 = vmatmul.mubr.bf16.gmra.mrb[0].mxu0 %v692
    %v815 = vpop.f32.mrb[0].mxu0
    %v816 = vadd.f32 %v646, %v815
    %v817 = vpop.f32.mrb[0].mxu0
    %v818 = vadd.f32 %v650, %v817
    %v819 = vpop.f32.mrb[0].mxu0
    %v820 = vadd.f32 %v646, %v819
    %v821 = vpop.f32.mrb[0].mxu0
    %v822 = vadd.f32 %v650, %v821
    %823 = vmatprep.mubr.bf16.mxu0 0
    %824 = vmatmul.mubr.bf16.gmra.mrb[0].mxu0 %v695
    %v825 = vpop.f32.mrb[0].mxu0
    %v826 = vadd.f32 %v646, %v825
    %v827 = vpop.f32.mrb[0].mxu0
    %v828 = vadd.f32 %v650, %v827
    %v829 = vpop.f32.mrb[0].mxu0
    %v830 = vadd.f32 %v646, %v829
    %v831 = vpop.f32.mrb[0].mxu0
    %v832 = vadd.f32 %v650, %v831
    %833 = vmatprep.mubr.bf16.mxu0 0
    %834 = vmatmul.mubr.bf16.gmra.mrb[0].mxu0 %v698
    %v835 = vpop.f32.mrb[0].mxu0
    %v836 = vadd.f32 %v646, %v835
    %v837 = vpop.f32.mrb[0].mxu0
    %v838 = vadd.f32 %v650, %v837
    %v839 = vpop.f32.mrb[0].mxu0
    %v840 = vadd.f32 %v646, %v839
    %v841 = vpop.f32.mrb[0].mxu0
    %v842 = vadd.f32 %v650, %v841
    %843 = vmatprep.mubr.bf16.mxu0 0
    %844 = vmatmul.mubr.bf16.gmra.mrb[0].mxu0 %v701
    %v845 = vpop.f32.mrb[0].mxu0
    %v846 = vadd.f32 %v646, %v845
    %v847 = vpop.f32.mrb[0].mxu0
    %v848 = vadd.f32 %v650, %v847
    %v849 = vpop.f32.mrb[0].mxu0
    %v850 = vadd.f32 %v646, %v849
    %v851 = vpop.f32.mrb[0].mxu0
    %v852 = vadd.f32 %v650, %v851
    %853 = vmatprep.mubr.bf16.mxu0 0
    %854 = vmatmul.mubr.bf16.gmra.mrb[0].mxu0 %v704
    %v855 = vpop.f32.mrb[0].mxu0
    %v856 = vadd.f32 %v646, %v855
    %v857 = vpop.f32.mrb[0].mxu0
    %v858 = vadd.f32 %v650, %v857
    %v859 = vpop.f32.mrb[0].mxu0
    %v860 = vadd.f32 %v646, %v859
    %v861 = vpop.f32.mrb[0].mxu0
    %v862 = vadd.f32 %v650, %v861
    %863 = vmatprep.mubr.bf16.mxu0 0
    %864 = vmatmul.mubr.bf16.gmra.mrb[0].mxu0 %v707
    %v865 = vpop.f32.mrb[0].mxu0
    %v866 = vadd.f32 %v646, %v865
    %v867 = vpop.f32.mrb[0].mxu0
    %v868 = vadd.f32 %v650, %v867
    %v869 = vpop.f32.mrb[0].mxu0
    %v870 = vadd.f32 %v646, %v869
    %v871 = vpop.f32.mrb[0].mxu0
    %v872 = vadd.f32 %v650, %v871
    %873 = vmatprep.mubr.bf16.mxu0 0
    %874 = vmatmul.mubr.bf16.gmra.mrb[0].mxu0 %v710
    %v875 = vpop.f32.mrb[0].mxu0
    %v876 = vadd.f32 %v646, %v875
    %v877 = vpop.f32.mrb[0].mxu0
    %v878 = vadd.f32 %v650, %v877
    %v879 = vpop.f32.mrb[0].mxu0
    %v880 = vadd.f32 %v646, %v879
    %v881 = vpop.f32.mrb[0].mxu0
    %v882 = vadd.f32 %v650, %v881
    %883 = vmatprep.mubr.bf16.mxu0 0
    %884 = vmatmul.mubr.bf16.gmra.mrb[0].mxu0 %v713
    %v885 = vpop.f32.mrb[0].mxu0
    %v886 = vadd.f32 %v646, %v885
    %v887 = vpop.f32.mrb[0].mxu0
    %v888 = vadd.f32 %v650, %v887
    %v889 = vpop.f32.mrb[0].mxu0
    %v890 = vadd.f32 %v646, %v889
    %v891 = vpop.f32.mrb[0].mxu0
    %v892 = vadd.f32 %v650, %v891
    %893 = vmatprep.mubr.bf16.mxu0 0
    %894 = vmatmul.mubr.bf16.gmra.mrb[0].mxu0 %v716
    %v895 = vpop.f32.mrb[0].mxu0
    %v896 = vadd.f32 %v646, %v895
    %v897 = vpop.f32.mrb[0].mxu0
    %v898 = vadd.f32 %v650, %v897
    %v899 = vpop.f32.mrb[0].mxu0
    %v900 = vadd.f32 %v646, %v899
    %v901 = vpop.f32.mrb[0].mxu0
    %v902 = vadd.f32 %v650, %v901
    %903 = vmatprep.mubr.bf16.mxu0 0
    %904 = vmatmul.mubr.bf16.gmra.mrb[0].mxu0 %v719
    %v905 = vpop.f32.mrb[0].mxu0
    %v906 = vadd.f32 %v646, %v905
    %v907 = vpop.f32.mrb[0].mxu0
    %v908 = vadd.f32 %v650, %v907
    %v909 = vpop.f32.mrb[0].mxu0
    %v910 = vadd.f32 %v646, %v909
    %v911 = vpop.f32.mrb[0].mxu0
    %v912 = vadd.f32 %v650, %v911
    %913 = vdwg.mxu0
    %914 = vst [vmem:[#allocation2] sm:$0xff] %v756
    %915 = vst [vmem:[#allocation2 + $0x8] sm:$0xff] %v758
    %916 = vst [vmem:[#allocation2 + $0x10] sm:$0xff] %v760
    %917 = vst [vmem:[#allocation2 + $0x18] sm:$0xff] %v762
    %918 = vst [vmem:[#allocation2 + $0x20] sm:$0xff] %v766
    %919 = vst [vmem:[#allocation2 + $0x28] sm:$0xff] %v768
    %920 = vst [vmem:[#allocation2 + $0x30] sm:$0xff] %v770
    %921 = vst [vmem:[#allocation2 + $0x38] sm:$0xff] %v772
    %922 = vst [vmem:[#allocation2 + $0x40] sm:$0xff] %v776
    %923 = vst [vmem:[#allocation2 + $0x48] sm:$0xff] %v778
    %924 = vst [vmem:[#allocation2 + $0x50] sm:$0xff] %v780
    %925 = vst [vmem:[#allocation2 + $0x58] sm:$0xff] %v782
    %926 = vst [vmem:[#allocation2 + $0x60] sm:$0xff] %v786
    %927 = vst [vmem:[#allocation2 + $0x68] sm:$0xff] %v788
    %928 = vst [vmem:[#allocation2 + $0x70] sm:$0xff] %v790
    %929 = vst [vmem:[#allocation2 + $0x78] sm:$0xff] %v792
    %930 = vst [vmem:[#allocation2 + $0x80] sm:$0xff] %v796
    %931 = vst [vmem:[#allocation2 + $0x88] sm:$0xff] %v798
    %932 = vst [vmem:[#allocation2 + $0x90] sm:$0xff] %v800
    %933 = vst [vmem:[#allocation2 + $0x98] sm:$0xff] %v802
    %934 = vst [vmem:[#allocation2 + $0xa0] sm:$0xff] %v806
    %935 = vst [vmem:[#allocation2 + $0xa8] sm:$0xff] %v808
    %936 = vst [vmem:[#allocation2 + $0xb0] sm:$0xff] %v810
    %937 = vst [vmem:[#allocation2 + $0xb8] sm:$0xff] %v812
    %938 = vst [vmem:[#allocation2 + $0xc0] sm:$0xff] %v816
    %939 = vst [vmem:[#allocation2 + $0xc8] sm:$0xff] %v818
    %940 = vst [vmem:[#allocation2 + $0xd0] sm:$0xff] %v820
    %941 = vst [vmem:[#allocation2 + $0xd8] sm:$0xff] %v822
    %942 = vst [vmem:[#allocation2 + $0xe0] sm:$0xff] %v826
    %943 = vst [vmem:[#allocation2 + $0xe8] sm:$0xff] %v828
    %944 = vst [vmem:[#allocation2 + $0xf0] sm:$0xff] %v830
    %945 = vst [vmem:[#allocation2 + $0xf8] sm:$0xff] %v832
    %946 = vst [vmem:[#allocation2 + $0x100] sm:$0xff] %v836
    %947 = vst [vmem:[#allocation2 + $0x108] sm:$0xff] %v838
    %948 = vst [vmem:[#allocation2 + $0x110] sm:$0xff] %v840
    %949 = vst [vmem:[#allocation2 + $0x118] sm:$0xff] %v842
    %950 = vst [vmem:[#allocation2 + $0x120] sm:$0xff] %v846
    %951 = vst [vmem:[#allocation2 + $0x128] sm:$0xff] %v848
    %952 = vst [vmem:[#allocation2 + $0x130] sm:$0xff] %v850
    %953 = vst [vmem:[#allocation2 + $0x138] sm:$0xff] %v852
    %954 = vst [vmem:[#allocation2 + $0x140] sm:$0xff] %v856
    %955 = vst [vmem:[#allocation2 + $0x148] sm:$0xff] %v858
    %956 = vst [vmem:[#allocation2 + $0x150] sm:$0xff] %v860
    %957 = vst [vmem:[#allocation2 + $0x158] sm:$0xff] %v862
    %958 = vst [vmem:[#allocation2 + $0x160] sm:$0xff] %v866
    %959 = vst [vmem:[#allocation2 + $0x168] sm:$0xff] %v868
    %960 = vst [vmem:[#allocation2 + $0x170] sm:$0xff] %v870
    %961 = vst [vmem:[#allocation2 + $0x178] sm:$0xff] %v872
    %962 = vst [vmem:[#allocation2 + $0x180] sm:$0xff] %v876
    %963 = vst [vmem:[#allocation2 + $0x188] sm:$0xff] %v878
    %964 = vst [vmem:[#allocation2 + $0x190] sm:$0xff] %v880
    %965 = vst [vmem:[#allocation2 + $0x198] sm:$0xff] %v882
    %966 = vst [vmem:[#allocation2 + $0x1a0] sm:$0xff] %v886
    %967 = vst [vmem:[#allocation2 + $0x1a8] sm:$0xff] %v888
    %968 = vst [vmem:[#allocation2 + $0x1b0] sm:$0xff] %v890
    %969 = vst [vmem:[#allocation2 + $0x1b8] sm:$0xff] %v892
    %970 = vst [vmem:[#allocation2 + $0x1c0] sm:$0xff] %v896
    %971 = vst [vmem:[#allocation2 + $0x1c8] sm:$0xff] %v898
    %972 = vst [vmem:[#allocation2 + $0x1d0] sm:$0xff] %v900
    %973 = vst [vmem:[#allocation2 + $0x1d8] sm:$0xff] %v902
    %974 = vst [vmem:[#allocation2 + $0x1e0] sm:$0xff] %v906
    %975 = vst [vmem:[#allocation2 + $0x1e8] sm:$0xff] %v908
    %976 = vst [vmem:[#allocation2 + $0x1f0] sm:$0xff] %v910
    %977 = vst [vmem:[#allocation2 + $0x1f8] sm:$0xff] %v912
    // Predicated region
    $region30: #{tpu_custom_call.1} parent=1 // pred_check
      _
    $region31: #{tpu_custom_call.1} parent=1 // pred_check_branch
      %979 = sbr.rel (0) target = $region33
    $region32: #{tpu_custom_call.1} parent=1 // pred_region
      %s981 = ssub.s32 8192, 8192
      %982 = vsyncadd [#allocation3], %s981
      %s983 = sshll.u32 [#allocation2], 4
      %s984 = int_to_ptr.vmem [resolvable:$true] %s983
      %989 = dma.vmem_to_hbm [thread:$0]  %s984, 8192, %s7, [#allocation3], 256, 256, 16
    $region33: #{tpu_custom_call.1} parent=1 // pred_fallthru
      _
    // Predicated region
    $region34: #{tpu_custom_call.1} parent=1 // pred_check
      _
    $region35: #{tpu_custom_call.1} parent=1 // pred_check_branch
      %991 = sbr.rel (0) target = $region37
    $region36: #{tpu_custom_call.1} parent=1 // pred_region
      %992 = dma.done [#allocation3], 8192
    $region37: #{tpu_custom_call.1} parent=1 // pred_fallthru
      _
    %993 = vsyncpa [#allocation3], 1

</llo_original>
